<compile_context>
chip_gen: v7x
topology: tpu7x:2x2x1
jax: 0.10.0
libtpu: 0.0.40
codegen_flags: <defaults>
</compile_context>

<pallas_src>
import math

import jax
import jax.numpy as jnp
from jax.experimental import pallas as pl
from jax.experimental.pallas import tpu as pltpu


def _round_up(n, m):
    return ((n + m - 1) // m) * m


def _make_linear_relu_kernel(compute_dtype):
    def kernel(x_ref, w_ref, b_ref, o_ref):
        # MXU matmul (f32 accumulation) + bias add + ReLU on the VPU, all in VMEM.
        x = x_ref[...].astype(compute_dtype)
        w = w_ref[...].astype(compute_dtype)
        y = jnp.dot(x, w, preferred_element_type=jnp.float32)
        y = y + b_ref[...]                      # (1, OUT) broadcasts over rows
        o_ref[...] = jnp.maximum(y, 0.0).astype(o_ref.dtype)

    return kernel


def statictics_net_forward(
    x,
    w,
    b,
    *,
    block_b=8192,
    compute_dtype=jnp.bfloat16,
    force_pallas=False,
    small_batch_threshold=2048,
):
    """relu(x @ w + b). x: (B, IN), w: (IN, OUT), b: (OUT,) — all float32."""
    B, IN = x.shape
    IN_w, OUT = w.shape
    assert IN == IN_w
    assert b.shape == (OUT,)

    # Small batches: a single-tile pallas_call has nothing to pipeline and pays
    # full launch + DMA-descriptor overhead; plain fused XLA wins outright.
    if (not force_pallas) and B < small_batch_threshold:
        y = jnp.dot(
            x.astype(compute_dtype),
            w.astype(compute_dtype),
            preferred_element_type=jnp.float32,
        ) + b
        return jnp.maximum(y, 0.0).astype(x.dtype)

    # Batch tile: big (amortize per-step overhead), multiple of 8, but capped
    # at ~half the batch so the grid has >= 2 steps (pipelining + both v7x TCs).
    TB = min(block_b, max(8, _round_up(pl.cdiv(B, 2), 8)))
    grid = (pl.cdiv(B, TB),)

    b2 = b.reshape(1, OUT)
    itemsize = jnp.dtype(x.dtype).itemsize

    out = pl.pallas_call(
        _make_linear_relu_kernel(compute_dtype),
        out_shape=jax.ShapeDtypeStruct((B, OUT), x.dtype),
        grid=grid,
        in_specs=[
            # Streamed per batch tile; last dim == full extent (25) — no K pad.
            pl.BlockSpec((TB, IN), lambda i: (i, 0)),
            # Weights / bias: constant index map -> resident in VMEM.
            pl.BlockSpec((IN, OUT), lambda i: (0, 0)),
            pl.BlockSpec((1, OUT), lambda i: (0, 0)),
        ],
        # Lane-dense (TB, 128) output tiles; ragged final block is masked.
        out_specs=pl.BlockSpec((TB, OUT), lambda i: (i, 0)),
        compiler_params=pltpu.CompilerParams(
            # Independent batch tiles -> shard across v7x's two TensorCores.
            dimension_semantics=("parallel",),
        ),
        cost_estimate=pl.CostEstimate(
            flops=2 * B * IN * OUT,
            transcendentals=0,
            bytes_accessed=itemsize * (B * IN + B * OUT) + 4 * (IN * OUT + OUT),
        ),
    )(x, w, b2)

    return out


def _reference(x, w, b, compute_dtype):
    """Pure-JAX reference matching the kernel's compute dtype."""
    y = jnp.dot(
        x.astype(compute_dtype),
        w.astype(compute_dtype),
        preferred_element_type=jnp.float32,
    ) + b
    return jnp.maximum(y, 0.0)


def init_params(key, input_size=25, output_size=128):
    """Deterministic init mimicking torch.nn.Linear defaults (Kaiming-uniform)."""
    k_w, k_b = jax.random.split(key)
    bound = 1.0 / math.sqrt(input_size)
    # PyTorch stores weight as (OUT, IN); we keep (IN, OUT) for the kernel.
    w = jax.random.uniform(k_w, (input_size, output_size), jnp.float32, -bound, bound)
    b = jax.random.uniform(k_b, (output_size,), jnp.float32, -bound, bound)
    return w, b


if __name__ == "__main__":
    input_size = 25
    output_size = 128

    key = jax.random.PRNGKey(0)
    k_x, k_p = jax.random.split(key)
    w, b = init_params(k_p, input_size, output_size)

    # --- 1) Small batch, Pallas path forced (exercise the kernel itself). ---
    batch = 8
    x = jax.random.normal(k_x, (batch, input_size), dtype=jnp.float32)
    out = jax.block_until_ready(statictics_net_forward(x, w, b, force_pallas=True))
    ref_bf16 = _reference(x, w, b, jnp.bfloat16)
    ref_f32 = _reference(x, w, b, jnp.float32)
    assert out.shape == (batch, output_size)
    assert jnp.allclose(out, ref_bf16, atol=1e-4, rtol=1e-4)
    assert jnp.allclose(out, ref_f32, atol=2e-2, rtol=2e-2)

    # --- 2) Non-tile-multiple batch, multi-step grid with a ragged edge. ---
    x2 = jax.random.normal(jax.random.PRNGKey(1), (1000, input_size), jnp.float32)
    out2 = jax.block_until_ready(
        statictics_net_forward(x2, w, b, block_b=256, force_pallas=True)
    )
    assert out2.shape == (1000, output_size)
    assert jnp.allclose(out2, _reference(x2, w, b, jnp.bfloat16), atol=1e-4, rtol=1e-4)
    assert jnp.allclose(out2, _reference(x2, w, b, jnp.float32), atol=2e-2, rtol=2e-2)

    # --- 3) Exact-f32 compute dtype through the kernel (loose bound is vs the
    #         XLA reference's own matmul precision, not the kernel). ---
    out3 = jax.block_until_ready(
        statictics_net_forward(x, w, b, compute_dtype=jnp.float32, force_pallas=True)
    )
    assert jnp.allclose(out3, ref_f32, atol=2e-2, rtol=2e-2)

    # --- 4) Auto small-batch fast path (plain XLA). ---
    out4 = jax.block_until_ready(statictics_net_forward(x, w, b))
    assert jnp.allclose(out4, ref_bf16, atol=1e-4, rtol=1e-4)

    print("KERNEL_OK")
</pallas_src>

<mosaic_0001>
module attributes {stable_mosaic.version = 11 : i64} {
  func.func @kernel(%arg0: i32, %arg1: memref<8x25xf32, #tpu.memory_space<vmem>>, %arg2: memref<25x128xf32, #tpu.memory_space<vmem>>, %arg3: memref<1x128xf32, #tpu.memory_space<vmem>>, %arg4: memref<8x128xf32, #tpu.memory_space<vmem>>) attributes {dimension_semantics = [#tpu.dimension_semantics<parallel>], iteration_bounds = array<i64: 1>, scalar_prefetch = 0 : i64, scratch_operands = 0 : i64, tpu.core_type = #tpu.core_type<tc>, window_params = [{transform_indices = @transform_0, window_bounds = array<i64: 8, 25>}, {pipeline_mode = #tpu.pipeline_mode<synchronous>, transform_indices = @transform_1, window_bounds = array<i64: 25, 128>}, {pipeline_mode = #tpu.pipeline_mode<synchronous>, transform_indices = @transform_2, window_bounds = array<i64: 1, 128>}, {transform_indices = @transform_3, window_bounds = array<i64: 8, 128>}]} {
    %c0 = arith.constant 0 : index
    %c0_0 = arith.constant 0 : index
    %0 = vector.load %arg1[%c0, %c0_0] : memref<8x25xf32, #tpu.memory_space<vmem>>, vector<8x25xf32>
    %1 = arith.truncf %0 : vector<8x25xf32> to vector<8x25xbf16>
    %c0_1 = arith.constant 0 : index
    %c0_2 = arith.constant 0 : index
    %2 = vector.load %arg2[%c0_1, %c0_2] : memref<25x128xf32, #tpu.memory_space<vmem>>, vector<25x128xf32>
    %3 = arith.truncf %2 : vector<25x128xf32> to vector<25x128xbf16>
    %cst = arith.constant dense<0.000000e+00> : vector<8x128xf32>
    %4 = tpu.matmul %1, %3, %cst {dimension_numbers = #tpu.dot_dimension_numbers<[1], [0], [0], [1], [0, 0, 1, 1], [], []>} : vector<8x25xbf16>, vector<25x128xbf16>, vector<8x128xf32> -> vector<8x128xf32>
    %c0_3 = arith.constant 0 : index
    %c0_4 = arith.constant 0 : index
    %5 = vector.load %arg3[%c0_3, %c0_4] : memref<1x128xf32, #tpu.memory_space<vmem>>, vector<1x128xf32>
    %6 = vector.broadcast %5 : vector<1x128xf32> to vector<8x128xf32>
    %7 = arith.addf %4, %6 : vector<8x128xf32>
    %cst_5 = arith.constant 0.000000e+00 : f32
    %8 = vector.broadcast %cst_5 : f32 to vector<8x128xf32>
    %9 = arith.maximumf %7, %8 : vector<8x128xf32>
    %c0_6 = arith.constant 0 : index
    %c0_7 = arith.constant 0 : index
    %10 = vector.load %arg4[%c0_6, %c0_7] : memref<8x128xf32, #tpu.memory_space<vmem>>, vector<8x128xf32>
    tpu.vector_store %arg4[%c0_6, %c0_7], %9 {strides = array<i32>} : memref<8x128xf32, #tpu.memory_space<vmem>>, vector<8x128xf32>,
    return
  }
  func.func @transform_0(%arg0: i32) -> (i32, i32) {
    %c0_i32 = arith.constant 0 : i32
    %c0_i32_0 = arith.constant 0 : i32
    return %arg0, %c0_i32 : i32, i32
  }
  func.func @transform_1(%arg0: i32) -> (i32, i32) {
    %c0_i32 = arith.constant 0 : i32
    %c0_i32_0 = arith.constant 0 : i32
    %c0_i32_1 = arith.constant 0 : i32
    return %c0_i32, %c0_i32_0 : i32, i32
  }
  func.func @transform_2(%arg0: i32) -> (i32, i32) {
    %c0_i32 = arith.constant 0 : i32
    %c0_i32_0 = arith.constant 0 : i32
    %c0_i32_1 = arith.constant 0 : i32
    return %c0_i32, %c0_i32_0 : i32, i32
  }
  func.func @transform_3(%arg0: i32) -> (i32, i32) {
    %c0_i32 = arith.constant 0 : i32
    %c0_i32_0 = arith.constant 0 : i32
    return %arg0, %c0_i32 : i32, i32
  }
}

</mosaic_0001>

<llo_original>
// kernel: tpu_custom_call.1
$region0: #{tpu_custom_call.1}
  #allocation0 [shape = 'u32[]', space=smem, size = 0x4, offset = 0x4, fixed_abs, tag = 'smem constant byte address 0x4 - core index']
  #allocation1 [shape = 'u32[144,128]{1,0:T(1,128)}', space=vmem, size = 0x12000, scoped, tag = 'internal scratch']
  %s0 = inlined_call_operand.hbm [shape: f32[8,25], index: 0, kind: input, shape index: {}]
  %s1 = inlined_call_operand.hbm [shape: f32[25,128], index: 1, kind: input, shape index: {}]
  %s2 = inlined_call_operand.vmem [shape: f32[1,128], index: 2, kind: input, shape index: {}]
  %s3 = inlined_call_operand.hbm [shape: f32[8,128], index: 3, kind: output, shape index: {}]
  %s4 = sld [smem:[#allocation0]]
  $region30: #{tpu_custom_call.1} parent=0
    _
  %s6 = ssub.s32 1, %s4
  %s7 = scalar_select 0, %s6, %s4
  $region1: #{tpu_custom_call.1} parent=0
    #allocation2 [shape = 'u8[4096]{0}', space=vmem, size = 0x1000, scoped, tag = 'input window, operand 0, single buffered']
    #allocation3 [shape = 's32[1]{0}', space=sflag, size = 0x4, scoped, tag = 'scoped memory for tpu_custom_call.1']
    #allocation4 [shape = 's32[1]{0}', space=sflag, size = 0x4, scoped, tag = 'scoped memory for tpu_custom_call.1']
    #allocation5 [shape = 'u8[16384]{0}', space=vmem, size = 0x4000, scoped, tag = 'input window, operand 1, single buffered']
    #allocation6 [shape = 's32[1]{0}', space=sflag, size = 0x4, scoped, tag = 'scoped memory for tpu_custom_call.1']
    #allocation7 [shape = 'u8[4096]{0}', space=vmem, size = 0x1000, scoped, tag = 'output window, operand 0, single buffered']
    %8 = vsyncpa [#allocation3], 0
    %9 = vsyncpa [#allocation6], 0
    %10 = vsyncpa [#allocation4], 0
    // Predicated region
    $region2: #{tpu_custom_call.1} parent=1 // pred_check
      _
    $region3: #{tpu_custom_call.1} parent=1 // pred_check_branch
      %12 = sbr.rel (0) target = $region5
    $region4: #{tpu_custom_call.1} parent=1 // pred_region
      %s14 = ssub.s32 128, 128
      %15 = vsyncadd [#allocation3], %s14
      %s17 = sshll.u32 [#allocation2], 4
      %s18 = int_to_ptr.vmem [resolvable:$true] %s17
      %20 = dma.hbm_to_vmem [thread:$0]  %s0, 128, %s18, [#allocation3]
    $region5: #{tpu_custom_call.1} parent=1 // pred_fallthru
      _
    // Predicated region
    $region6: #{tpu_custom_call.1} parent=1 // pred_check
      _
    $region7: #{tpu_custom_call.1} parent=1 // pred_check_branch
      %22 = sbr.rel (0) target = $region9
    $region8: #{tpu_custom_call.1} parent=1 // pred_region
      %s24 = ssub.s32 512, 512
      %25 = vsyncadd [#allocation6], %s24
      %s26 = sshll.u32 [#allocation5], 4
      %s27 = int_to_ptr.vmem [resolvable:$true] %s26
      %32 = dma.hbm_to_vmem [thread:$0]  %s1, 512, %s27, [#allocation6], 128, 128, 8
    $region9: #{tpu_custom_call.1} parent=1 // pred_fallthru
      _
    // Predicated region
    $region10: #{tpu_custom_call.1} parent=1 // pred_check
      _
    $region11: #{tpu_custom_call.1} parent=1 // pred_check_branch
      %34 = sbr.rel (0) target = $region13
    $region12: #{tpu_custom_call.1} parent=1 // pred_region
      _
    $region13: #{tpu_custom_call.1} parent=1 // pred_fallthru
      _
    // Predicated region
    $region14: #{tpu_custom_call.1} parent=1 // pred_check
      _
    $region15: #{tpu_custom_call.1} parent=1 // pred_check_branch
      %36 = sbr.rel (0) target = $region17
    $region16: #{tpu_custom_call.1} parent=1 // pred_region
      %37 = dma.done [#allocation3], 128
    $region17: #{tpu_custom_call.1} parent=1 // pred_fallthru
      _
    // Predicated region
    $region18: #{tpu_custom_call.1} parent=1 // pred_check
      _
    $region19: #{tpu_custom_call.1} parent=1 // pred_check_branch
      %39 = sbr.rel (0) target = $region21
    $region20: #{tpu_custom_call.1} parent=1 // pred_region
      %40 = dma.done [#allocation6], 512
    $region21: #{tpu_custom_call.1} parent=1 // pred_fallthru
      _
    %v42 = vld [vmem:[#allocation2] sm:$0xff]
    %v43 = vpack.c.bf16 %v42, %v42
    %v44 = vld [vmem:[#allocation5] sm:$0xff]
    %v45 = vld [vmem:[#allocation5 + $0x8] sm:$0xff]
    %v46 = vld [vmem:[#allocation5 + $0x10] sm:$0xff]
    %v47 = vld [vmem:[#allocation5 + $0x18] sm:$0x1]
    %v48 = vpack.c.bf16 %v45, %v44
    %v49 = vpack.c.bf16 %v47, %v46
    %v50 = vld [vmem:[%s2] sm:$0x1]
    %v52 = vlaneseq
    %v53 = vshrl.u32 %v52, 7
    %v54 = vsub.s32 0, %v53
    %v55 = vrot.slane %v50, %v54
    %vm57 = vcmask 203776
    %v59 = vsel %vm57, %v43, 0
    %vm61 = vcmask 1043456
    %vm62 = vcmask 1044480
    %v63 = vsel %vm61, 4294967295, 65535
    %v64 = vsel %vm62, %v63, 0
    %v66 = vand.u32 %v49, %v64
    %68 = vmatprep.subr.bf16.mxu0 0
    %69 = vmatpush1.bf16.msra.mxu0 %v48
    %70 = vmatprep.subr.bf16.mxu0 0
    %71 = vmatpush1.bf16.msra.mxu0 %v66
    %72 = vmatprep.subr.bf16.mxu0 0
    %73 = vmatpush1.bf16.msra.mxu0 0
    %74 = vmatprep.subr.bf16.mxu0 0
    %75 = vmatpush1.bf16.msra.mxu0 0
    %76 = vmatprep.subr.bf16.mxu0 0
    %77 = vmatpush1.bf16.msra.mxu0 0
    %78 = vmatprep.subr.bf16.mxu0 0
    %79 = vmatpush1.bf16.msra.mxu0 0
    %80 = vmatprep.subr.bf16.mxu0 0
    %81 = vmatpush1.bf16.msra.mxu0 0
    %82 = vmatprep.subr.bf16.mxu0 0
    %83 = vmatpush1.bf16.msra.mxu0 0
    %84 = vmatprep.subr.bf16.mxu0 0
    %85 = vmatpush1.bf16.msra.mxu0 0
    %86 = vmatprep.subr.bf16.mxu0 0
    %87 = vmatpush1.bf16.msra.mxu0 0
    %88 = vmatprep.subr.bf16.mxu0 0
    %89 = vmatpush1.bf16.msra.mxu0 0
    %90 = vmatprep.subr.bf16.mxu0 0
    %91 = vmatpush1.bf16.msra.mxu0 0
    %92 = vmatprep.subr.bf16.mxu0 0
    %93 = vmatpush1.bf16.msra.mxu0 0
    %94 = vmatprep.subr.bf16.mxu0 0
    %95 = vmatpush1.bf16.msra.mxu0 0
    %96 = vmatprep.subr.bf16.mxu0 0
    %97 = vmatpush1.bf16.msra.mxu0 0
    %98 = vmatprep.subr.bf16.mxu0 0
    %99 = vmatpush1.bf16.msra.mxu0 0
    %100 = vmatprep.mubr.bf16.mxu0 0
    %101 = vmatmul.mubr.bf16.gmra.mrb[0].mxu0 %v59
    %v102 = vpop.f32.mrb[0].mxu0
    %v103 = vadd.f32 %v55, %v102
    %v104 = vpop.f32.mrb[0].mxu0
    %v105 = vpop.f32.mrb[0].mxu0
    %v106 = vpop.f32.mrb[0].mxu0
    %107 = vdwg.mxu0
    %v108 = vmax.f32 %v103, 0.0
    %109 = vst [vmem:[#allocation7] sm:$0xff] %v108
    // Predicated region
    $region22: #{tpu_custom_call.1} parent=1 // pred_check
      _
    $region23: #{tpu_custom_call.1} parent=1 // pred_check_branch
      %111 = sbr.rel (0) target = $region25
    $region24: #{tpu_custom_call.1} parent=1 // pred_region
      %s113 = ssub.s32 128, 128
      %114 = vsyncadd [#allocation4], %s113
      %s116 = sshll.u32 [#allocation7], 4
      %s117 = int_to_ptr.vmem [resolvable:$true] %s116
      %119 = dma.vmem_to_hbm [thread:$0]  %s117, 128, %s3, [#allocation4]
    $region25: #{tpu_custom_call.1} parent=1 // pred_fallthru
      _
    // Predicated region
    $region26: #{tpu_custom_call.1} parent=1 // pred_check
      _
    $region27: #{tpu_custom_call.1} parent=1 // pred_check_branch
      %121 = sbr.rel (0) target = $region29
    $region28: #{tpu_custom_call.1} parent=1 // pred_region
      %122 = dma.done [#allocation4], 128
    $region29: #{tpu_custom_call.1} parent=1 // pred_fallthru
      _
    %123 = vsyncpa [#allocation3], 1
    %124 = vsyncpa [#allocation6], 1
    %125 = vsyncpa [#allocation4], 1

</llo_original>
